<compile_context>
chip_gen: v7x
topology: tpu7x:2x2x1
jax: 0.10.0
libtpu: 0.0.40
codegen_flags: <defaults>
</compile_context>

<pallas_src>
import jax
import jax.numpy as jnp
from jax import lax
from jax.experimental import pallas as pl
from jax.experimental.pallas import tpu as pltpu


def _round_up(x, m):
    return (x + m - 1) // m * m


def _patch_embed_kernel(patches_ref, w_ref, b_ref, o_ref):
    # (tm, K) bf16 @ (K, tn) bf16 -> f32 on the MXU, then f32 bias broadcast.
    acc = jnp.dot(patches_ref[...], w_ref[...],
                  preferred_element_type=jnp.float32)
    o_ref[...] = (acc + b_ref[...]).astype(o_ref.dtype)


def patch_embed_stem(x, weight, bias, patch_size, *, tm=1024, tn=1024,
                     out_dtype=None):
    """x: (B, C, T, H, W); weight: (dim, C, 1, p, p); bias: (dim,).

    Returns (B, T*(H//p)*(W//p), dim), matching
    conv3d -> reshape(B, dim, -1) -> permute(0, 2, 1).
    """
    B, C, T, H, W = x.shape
    p = patch_size
    assert H % p == 0 and W % p == 0, "H/W must be divisible by patch size"
    Hp, Wp = H // p, W // p
    dim = weight.shape[0]
    # For bandwidth-bound v6e, pass out_dtype=jnp.bfloat16 if downstream
    # consumes bf16 activations (halves output writeback bytes).
    out_dtype = x.dtype if out_dtype is None else out_dtype

    M = B * T * Hp * Wp
    K = C * p * p
    N = dim
    K_pad = _round_up(K, 128)          # lane-aligned contraction dim
    N_pad = _round_up(N, 128)          # lane-aligned weight/bias columns

    # ---- Patch extraction (glue; single XLA copy, done in bf16).
    # (B,C,T,Hp,p,Wp,p) -> (B,T,Hp,Wp,C,p,p) -> (M,K); inner (c,ph,pw) order
    # matches the Conv3d weight layout.  Row order (b,t,hp,wp) matches the
    # PyTorch reshape(B,dim,-1).permute(0,2,1) sequence order.
    xb = x.astype(jnp.bfloat16)
    patches = xb.reshape(B, C, T, Hp, p, Wp, p).transpose(0, 2, 3, 5, 1, 4, 6)
    patches = patches.reshape(M, K)
    if K_pad != K:
        patches = jnp.pad(patches, ((0, 0), (0, K_pad - K)))

    # Weight (dim, C*p*p) -> (K_pad, N_pad) bf16; bias -> (1, N_pad) f32.
    # Padding is zero, so padded output columns are exactly 0 (never stored
    # anyway: the output is (M, N) and ragged columns are lane-masked).
    w_mat = weight.reshape(dim, K).T.astype(jnp.bfloat16)
    w_mat = jnp.pad(w_mat, ((0, K_pad - K), (0, N_pad - N)))
    b_mat = jnp.pad(bias.astype(jnp.float32), (0, N_pad - N)).reshape(1, N_pad)

    # ---- N tiling: never ragged-split N_pad.  Full N_pad if it fits the
    # budget (dim=768 -> 768x768 bf16 weight = 1.1 MiB, trivially resident),
    # otherwise the largest 128-multiple divisor of N_pad <= tn.
    if N_pad <= tn:
        tn_eff = N_pad
    else:
        tn_eff = 128
        d = (tn // 128) * 128
        while d >= 128:
            if N_pad % d == 0:
                tn_eff = d
                break
            d -= 128

    # ---- M tiling: big row tiles amortize the ~0.35 us/step pipeline
    # overhead; keep >= 2 row blocks for mid-size M so the "parallel" i axis
    # can shard across TensorCores (v7x megacore).  cdiv + masked writeback
    # handles non-divisible M, so no padding of M is needed.
    if M <= 512:
        tm_eff = M                              # block dim == full is legal
    elif M <= tm:
        tm_eff = _round_up((M + 1) // 2, 8)     # 2 row blocks
    else:
        tm_eff = tm
    grid = (pl.cdiv(M, tm_eff), pl.cdiv(N_pad, tn_eff))

    flops = 2 * M * K_pad * N_pad
    bytes_accessed = (patches.size * 2 + w_mat.size * 2 + b_mat.size * 4
                      + M * N * jnp.dtype(out_dtype).itemsize)

    out = pl.pallas_call(
        _patch_embed_kernel,
        # Emit (M, N) directly: Pallas lane-masks ragged stores, so no
        # N_pad -> N slicing pass afterwards.
        out_shape=jax.ShapeDtypeStruct((M, N), out_dtype),
        grid_spec=pltpu.PrefetchScalarGridSpec(
            num_scalar_prefetch=0,
            grid=grid,
            in_specs=[
                pl.BlockSpec((tm_eff, K_pad), lambda i, j: (i, 0)),  # patches
                # With tn_eff == N_pad the block index is constant -> the
                # weight is DMA'd once and stays resident in VMEM.
                pl.BlockSpec((K_pad, tn_eff), lambda i, j: (0, j)),  # weight
                pl.BlockSpec((1, tn_eff), lambda i, j: (0, j)),      # bias
            ],
            out_specs=pl.BlockSpec((tm_eff, tn_eff), lambda i, j: (i, j)),
        ),
        compiler_params=pltpu.CompilerParams(
            dimension_semantics=("parallel", "parallel"),
            # Explicit limit: v5e scoped default is 16 MiB; tm=1024/tn=768
            # double-buffered is ~11 MiB, comfortably inside 32 MiB on every
            # generation (v7x physical is 64 MiB).
            vmem_limit_bytes=32 * 1024 * 1024,
        ),
        cost_estimate=pl.CostEstimate(
            flops=flops, transcendentals=0, bytes_accessed=bytes_accessed),
    )(patches, w_mat, b_mat)

    return out.reshape(B, T * Hp * Wp, N)


def _reference_conv3d(x, weight, bias, p):
    # Pure-JAX f32 reference using a real 3-D convolution (NCDHW / OIDHW).
    y = lax.conv_general_dilated(
        x, weight,
        window_strides=(1, p, p),
        padding="VALID",
        dimension_numbers=("NCDHW", "OIDHW", "NCDHW"),
    )
    y = y + bias.reshape(1, -1, 1, 1, 1)
    B, D = y.shape[0], y.shape[1]
    y = y.reshape(B, D, -1)
    return jnp.transpose(y, (0, 2, 1))


if __name__ == "__main__":
    # Small, module-consistent shapes:
    #   batch=2, channels=3, frames=4, image=16, patch=4, dim=32
    B, C, T, H, W = 2, 3, 4, 16, 16
    patch = 4
    dim = 32

    key = jax.random.PRNGKey(0)
    kx, kw, kb = jax.random.split(key, 3)

    x = jax.random.normal(kx, (B, C, T, H, W), dtype=jnp.float32)
    # Conv3d weight: (out_ch, in_ch, 1, p, p); bias: (out_ch,)
    weight = jax.random.normal(kw, (dim, C, 1, patch, patch),
                               dtype=jnp.float32) * 0.02
    bias = jax.random.normal(kb, (dim,), dtype=jnp.float32) * 0.02

    out = patch_embed_stem(x, weight, bias, patch)
    out = jax.block_until_ready(out)

    ref = _reference_conv3d(x, weight, bias, patch)
    assert out.shape == (B, T * (H // patch) * (W // patch), dim), out.shape
    # bf16 matmul inputs with f32 accumulation -> looser tolerance vs f32 conv.
    assert jnp.allclose(out, ref, atol=2e-2, rtol=2e-2), "mismatch vs reference"

    print("KERNEL_OK")
</pallas_src>

<mosaic_0001>
module attributes {stable_mosaic.version = 11 : i64} {
  func.func @_patch_embed_kernel(%arg0: i32, %arg1: i32, %arg2: memref<128x128xbf16, #tpu.memory_space<vmem>>, %arg3: memref<128x128xbf16, #tpu.memory_space<vmem>>, %arg4: memref<1x128xf32, #tpu.memory_space<vmem>>, %arg5: memref<128x128xf32, #tpu.memory_space<vmem>>) attributes {dimension_semantics = [#tpu.dimension_semantics<parallel>, #tpu.dimension_semantics<parallel>], iteration_bounds = array<i64: 1, 1>, scalar_prefetch = 0 : i64, scratch_operands = 0 : i64, tpu.core_type = #tpu.core_type<tc>, window_params = [{transform_indices = @transform_0, window_bounds = array<i64: 128, 128>}, {transform_indices = @transform_1, window_bounds = array<i64: 128, 128>}, {transform_indices = @transform_2, window_bounds = array<i64: 1, 128>}, {transform_indices = @transform_3, window_bounds = array<i64: 128, 128>}]} {
    %c0 = arith.constant 0 : index
    %c0_0 = arith.constant 0 : index
    %0 = vector.load %arg2[%c0, %c0_0] : memref<128x128xbf16, #tpu.memory_space<vmem>>, vector<128x128xbf16>
    %c0_1 = arith.constant 0 : index
    %c0_2 = arith.constant 0 : index
    %1 = vector.load %arg3[%c0_1, %c0_2] : memref<128x128xbf16, #tpu.memory_space<vmem>>, vector<128x128xbf16>
    %cst = arith.constant dense<0.000000e+00> : vector<128x128xf32>
    %2 = tpu.matmul %0, %1, %cst {dimension_numbers = #tpu.dot_dimension_numbers<[1], [0], [0], [1], [0, 0, 1, 1], [], []>} : vector<128x128xbf16>, vector<128x128xbf16>, vector<128x128xf32> -> vector<128x128xf32>
    %c0_3 = arith.constant 0 : index
    %c0_4 = arith.constant 0 : index
    %3 = vector.load %arg4[%c0_3, %c0_4] : memref<1x128xf32, #tpu.memory_space<vmem>>, vector<1x128xf32>
    %4 = vector.broadcast %3 : vector<1x128xf32> to vector<128x128xf32>
    %5 = arith.addf %2, %4 : vector<128x128xf32>
    %c0_5 = arith.constant 0 : index
    %c0_6 = arith.constant 0 : index
    %6 = vector.load %arg5[%c0_5, %c0_6] : memref<128x128xf32, #tpu.memory_space<vmem>>, vector<128x128xf32>
    tpu.vector_store %arg5[%c0_5, %c0_6], %5 {strides = array<i32>} : memref<128x128xf32, #tpu.memory_space<vmem>>, vector<128x128xf32>,
    return
  }
  func.func @transform_0(%arg0: i32, %arg1: i32) -> (i32, i32) {
    %c0_i32 = arith.constant 0 : i32
    %c0_i32_0 = arith.constant 0 : i32
    return %arg0, %c0_i32 : i32, i32
  }
  func.func @transform_1(%arg0: i32, %arg1: i32) -> (i32, i32) {
    %c0_i32 = arith.constant 0 : i32
    %c0_i32_0 = arith.constant 0 : i32
    return %c0_i32, %arg1 : i32, i32
  }
  func.func @transform_2(%arg0: i32, %arg1: i32) -> (i32, i32) {
    %c0_i32 = arith.constant 0 : i32
    %c0_i32_0 = arith.constant 0 : i32
    return %c0_i32, %arg1 : i32, i32
  }
  func.func @transform_3(%arg0: i32, %arg1: i32) -> (i32, i32) {
    %c0_i32 = arith.constant 0 : i32
    return %arg0, %arg1 : i32, i32
  }
}

</mosaic_0001>

<llo_original>
// kernel: tpu_custom_call.1
$region0: #{tpu_custom_call.1}
  #allocation0 [shape = 'u32[]', space=smem, size = 0x4, offset = 0x4, fixed_abs, tag = 'smem constant byte address 0x4 - core index']
  #allocation1 [shape = 'u32[144,128]{1,0:T(1,128)}', space=vmem, size = 0x12000, scoped, tag = 'internal scratch']
  %s0 = inlined_call_operand.hbm [shape: bf16[128,128], index: 0, kind: input, shape index: {}]
  %s1 = inlined_call_operand.hbm [shape: bf16[128,128], index: 1, kind: input, shape index: {}]
  %s2 = inlined_call_operand.vmem [shape: f32[1,128], index: 2, kind: input, shape index: {}]
  %s3 = inlined_call_operand.vmem [shape: f32[128,32], index: 3, kind: output, shape index: {}]
  %s4 = sld [smem:[#allocation0]]
  $region30: #{tpu_custom_call.1} parent=0
    _
  %s6 = ssub.s32 1, %s4
  %s7 = scalar_select 0, %s6, %s4
  $region1: #{tpu_custom_call.1} parent=0
    #allocation2 [shape = 'u8[32768]{0}', space=vmem, size = 0x8000, scoped, tag = 'input window, operand 0, single buffered']
    #allocation3 [shape = 's32[1]{0}', space=sflag, size = 0x4, scoped, tag = 'scoped memory for tpu_custom_call.1']
    #allocation4 [shape = 'u8[32768]{0}', space=vmem, size = 0x8000, scoped, tag = 'input window, operand 1, single buffered']
    #allocation5 [shape = 's32[1]{0}', space=sflag, size = 0x4, scoped, tag = 'scoped memory for tpu_custom_call.1']
    %8 = vsyncpa [#allocation3], 0
    %9 = vsyncpa [#allocation5], 0
    // Predicated region
    $region2: #{tpu_custom_call.1} parent=1 // pred_check
      _
    $region3: #{tpu_custom_call.1} parent=1 // pred_check_branch
      %11 = sbr.rel (0) target = $region5
    $region4: #{tpu_custom_call.1} parent=1 // pred_region
      %s13 = ssub.s32 1024, 1024
      %14 = vsyncadd [#allocation3], %s13
      %s15 = sshll.u32 [#allocation2], 4
      %s16 = int_to_ptr.vmem [resolvable:$true] %s15
      %21 = dma.hbm_to_vmem [thread:$0]  %s0, 1024, %s16, [#allocation3], 64, 64, 4
    $region5: #{tpu_custom_call.1} parent=1 // pred_fallthru
      _
    // Predicated region
    $region6: #{tpu_custom_call.1} parent=1 // pred_check
      _
    $region7: #{tpu_custom_call.1} parent=1 // pred_check_branch
      %23 = sbr.rel (0) target = $region9
    $region8: #{tpu_custom_call.1} parent=1 // pred_region
      %s25 = ssub.s32 1024, 1024
      %26 = vsyncadd [#allocation5], %s25
      %s27 = sshll.u32 [#allocation4], 4
      %s28 = int_to_ptr.vmem [resolvable:$true] %s27
      %33 = dma.hbm_to_vmem [thread:$0]  %s1, 1024, %s28, [#allocation5], 64, 64, 4
    $region9: #{tpu_custom_call.1} parent=1 // pred_fallthru
      _
    // Predicated region
    $region10: #{tpu_custom_call.1} parent=1 // pred_check
      _
    $region11: #{tpu_custom_call.1} parent=1 // pred_check_branch
      %35 = sbr.rel (0) target = $region13
    $region12: #{tpu_custom_call.1} parent=1 // pred_region
      _
    $region13: #{tpu_custom_call.1} parent=1 // pred_fallthru
      _
    // Predicated region
    $region14: #{tpu_custom_call.1} parent=1 // pred_check
      _
    $region15: #{tpu_custom_call.1} parent=1 // pred_check_branch
      %37 = sbr.rel (0) target = $region17
    $region16: #{tpu_custom_call.1} parent=1 // pred_region
      %38 = dma.done [#allocation3], 1024
    $region17: #{tpu_custom_call.1} parent=1 // pred_fallthru
      _
    // Predicated region
    $region18: #{tpu_custom_call.1} parent=1 // pred_check
      _
    $region19: #{tpu_custom_call.1} parent=1 // pred_check_branch
      %40 = sbr.rel (0) target = $region21
    $region20: #{tpu_custom_call.1} parent=1 // pred_region
      %41 = dma.done [#allocation5], 1024
    $region21: #{tpu_custom_call.1} parent=1 // pred_fallthru
      _
    %v43 = vld [vmem:[#allocation2] sm:$0xf]
    %v44 = vld [vmem:[#allocation2 + $0x4] sm:$0xf]
    %v45 = vld [vmem:[#allocation2 + $0x8] sm:$0xf]
    %v46 = vld [vmem:[#allocation2 + $0xc] sm:$0xf]
    %v47 = vld [vmem:[#allocation2 + $0x10] sm:$0xf]
    %v48 = vld [vmem:[#allocation2 + $0x14] sm:$0xf]
    %v49 = vld [vmem:[#allocation2 + $0x18] sm:$0xf]
    %v50 = vld [vmem:[#allocation2 + $0x1c] sm:$0xf]
    %v51 = vld [vmem:[#allocation2 + $0x20] sm:$0xf]
    %v52 = vld [vmem:[#allocation2 + $0x24] sm:$0xf]
    %v53 = vld [vmem:[#allocation2 + $0x28] sm:$0xf]
    %v54 = vld [vmem:[#allocation2 + $0x2c] sm:$0xf]
    %v55 = vld [vmem:[#allocation2 + $0x30] sm:$0xf]
    %v56 = vld [vmem:[#allocation2 + $0x34] sm:$0xf]
    %v57 = vld [vmem:[#allocation2 + $0x38] sm:$0xf]
    %v58 = vld [vmem:[#allocation2 + $0x3c] sm:$0xf]
    %v59 = vld [vmem:[#allocation4] sm:$0xf]
    %v60 = vld [vmem:[#allocation4 + $0x4] sm:$0xf]
    %v61 = vld [vmem:[#allocation4 + $0x8] sm:$0xf]
    %v62 = vld [vmem:[#allocation4 + $0xc] sm:$0xf]
    %v63 = vld [vmem:[#allocation4 + $0x10] sm:$0xf]
    %v64 = vld [vmem:[#allocation4 + $0x14] sm:$0xf]
    %v65 = vld [vmem:[#allocation4 + $0x18] sm:$0xf]
    %v66 = vld [vmem:[#allocation4 + $0x1c] sm:$0xf]
    %v67 = vld [vmem:[#allocation4 + $0x20] sm:$0xf]
    %v68 = vld [vmem:[#allocation4 + $0x24] sm:$0xf]
    %v69 = vld [vmem:[#allocation4 + $0x28] sm:$0xf]
    %v70 = vld [vmem:[#allocation4 + $0x2c] sm:$0xf]
    %v71 = vld [vmem:[#allocation4 + $0x30] sm:$0xf]
    %v72 = vld [vmem:[#allocation4 + $0x34] sm:$0xf]
    %v73 = vld [vmem:[#allocation4 + $0x38] sm:$0xf]
    %v74 = vld [vmem:[#allocation4 + $0x3c] sm:$0xf]
    %v75 = vld [vmem:[%s2] sm:$0x1]
    %v77 = vlaneseq
    %v78 = vshrl.u32 %v77, 7
    %v79 = vsub.s32 0, %v78
    %v80 = vrot.slane %v75, %v79
    %v98 = vunpack.c.l.b16 %v43
    %v99 = vunpack.c.l.b16 %v44
    %v100 = vunpack.c.l.b16 %v45
    %v101 = vunpack.c.l.b16 %v46
    %v102 = vunpack.c.l.b16 %v47
    %v103 = vunpack.c.l.b16 %v48
    %v104 = vunpack.c.l.b16 %v49
    %v105 = vunpack.c.l.b16 %v50
    %v106 = vunpack.c.l.b16 %v51
    %v107 = vunpack.c.l.b16 %v52
    %v108 = vunpack.c.l.b16 %v53
    %v109 = vunpack.c.l.b16 %v54
    %v110 = vunpack.c.l.b16 %v55
    %v111 = vunpack.c.l.b16 %v56
    %v112 = vunpack.c.l.b16 %v57
    %v113 = vunpack.c.l.b16 %v58
    %v114 = vpack.c.b16 %v99, %v98
    %v115 = vpack.c.b16 %v101, %v100
    %v116 = vpack.c.b16 %v103, %v102
    %v117 = vpack.c.b16 %v105, %v104
    %v118 = vpack.c.b16 %v107, %v106
    %v119 = vpack.c.b16 %v109, %v108
    %v120 = vpack.c.b16 %v111, %v110
    %v121 = vpack.c.b16 %v113, %v112
    %v146 = vunpack.c.l.b16 %v59
    %v147 = vunpack.c.l.b16 %v60
    %v148 = vunpack.c.l.b16 %v61
    %v149 = vunpack.c.l.b16 %v62
    %v150 = vunpack.c.l.b16 %v63
    %v151 = vunpack.c.l.b16 %v64
    %v152 = vunpack.c.l.b16 %v65
    %v153 = vunpack.c.l.b16 %v66
    %v154 = vunpack.c.l.b16 %v67
    %v155 = vunpack.c.l.b16 %v68
    %v156 = vunpack.c.l.b16 %v69
    %v157 = vunpack.c.l.b16 %v70
    %v158 = vunpack.c.l.b16 %v71
    %v159 = vunpack.c.l.b16 %v72
    %v160 = vunpack.c.l.b16 %v73
    %v161 = vunpack.c.l.b16 %v74
    %v162 = vpack.c.b16 %v147, %v146
    %v163 = vpack.c.b16 %v149, %v148
    %v164 = vpack.c.b16 %v151, %v150
    %v165 = vpack.c.b16 %v153, %v152
    %v166 = vpack.c.b16 %v155, %v154
    %v167 = vpack.c.b16 %v157, %v156
    %v168 = vpack.c.b16 %v159, %v158
    %v169 = vpack.c.b16 %v161, %v160
    %178 = vmatprep.subr.bf16.mxu0 0
    %179 = vmatpush1.bf16.msra.mxu0 %v162
    %180 = vmatprep.subr.bf16.mxu0 0
    %181 = vmatpush1.bf16.msra.mxu0 %v163
    %182 = vmatprep.subr.bf16.mxu0 0
    %183 = vmatpush1.bf16.msra.mxu0 %v164
    %184 = vmatprep.subr.bf16.mxu0 0
    %185 = vmatpush1.bf16.msra.mxu0 %v165
    %186 = vmatprep.subr.bf16.mxu0 0
    %187 = vmatpush1.bf16.msra.mxu0 %v166
    %188 = vmatprep.subr.bf16.mxu0 0
    %189 = vmatpush1.bf16.msra.mxu0 %v167
    %190 = vmatprep.subr.bf16.mxu0 0
    %191 = vmatpush1.bf16.msra.mxu0 %v168
    %192 = vmatprep.subr.bf16.mxu0 0
    %193 = vmatpush1.bf16.msra.mxu0 %v169
    %194 = vmatprep.subr.bf16.mxu0 0
    %195 = vmatpush1.bf16.msra.mxu0 0
    %196 = vmatprep.subr.bf16.mxu0 0
    %197 = vmatpush1.bf16.msra.mxu0 0
    %198 = vmatprep.subr.bf16.mxu0 0
    %199 = vmatpush1.bf16.msra.mxu0 0
    %200 = vmatprep.subr.bf16.mxu0 0
    %201 = vmatpush1.bf16.msra.mxu0 0
    %202 = vmatprep.subr.bf16.mxu0 0
    %203 = vmatpush1.bf16.msra.mxu0 0
    %204 = vmatprep.subr.bf16.mxu0 0
    %205 = vmatpush1.bf16.msra.mxu0 0
    %206 = vmatprep.subr.bf16.mxu0 0
    %207 = vmatpush1.bf16.msra.mxu0 0
    %208 = vmatprep.subr.bf16.mxu0 0
    %209 = vmatpush1.bf16.msra.mxu0 0
    %210 = vmatprep.mubr.bf16.mxu0 0
    %211 = vmatmul.mubr.bf16.gmra.mrb[0].mxu0 %v114
    %v212 = vpop.f32.mrb[0].mxu0
    %v213 = vadd.f32 %v80, %v212
    %v214 = vpop.f32.mrb[0].mxu0
    %v215 = vpop.f32.mrb[0].mxu0
    %v216 = vadd.f32 %v80, %v215
    %v217 = vpop.f32.mrb[0].mxu0
    %218 = vmatprep.mubr.bf16.mxu0 0
    %219 = vmatmul.mubr.bf16.gmra.mrb[0].mxu0 %v115
    %v220 = vpop.f32.mrb[0].mxu0
    %v221 = vadd.f32 %v80, %v220
    %v222 = vpop.f32.mrb[0].mxu0
    %v223 = vpop.f32.mrb[0].mxu0
    %v224 = vadd.f32 %v80, %v223
    %v225 = vpop.f32.mrb[0].mxu0
    %226 = vmatprep.mubr.bf16.mxu0 0
    %227 = vmatmul.mubr.bf16.gmra.mrb[0].mxu0 %v116
    %v228 = vpop.f32.mrb[0].mxu0
    %v229 = vadd.f32 %v80, %v228
    %v230 = vpop.f32.mrb[0].mxu0
    %v231 = vpop.f32.mrb[0].mxu0
    %v232 = vadd.f32 %v80, %v231
    %v233 = vpop.f32.mrb[0].mxu0
    %234 = vmatprep.mubr.bf16.mxu0 0
    %235 = vmatmul.mubr.bf16.gmra.mrb[0].mxu0 %v117
    %v236 = vpop.f32.mrb[0].mxu0
    %v237 = vadd.f32 %v80, %v236
    %v238 = vpop.f32.mrb[0].mxu0
    %v239 = vpop.f32.mrb[0].mxu0
    %v240 = vadd.f32 %v80, %v239
    %v241 = vpop.f32.mrb[0].mxu0
    %242 = vmatprep.mubr.bf16.mxu0 0
    %243 = vmatmul.mubr.bf16.gmra.mrb[0].mxu0 %v118
    %v244 = vpop.f32.mrb[0].mxu0
    %v245 = vadd.f32 %v80, %v244
    %v246 = vpop.f32.mrb[0].mxu0
    %v247 = vpop.f32.mrb[0].mxu0
    %v248 = vadd.f32 %v80, %v247
    %v249 = vpop.f32.mrb[0].mxu0
    %250 = vmatprep.mubr.bf16.mxu0 0
    %251 = vmatmul.mubr.bf16.gmra.mrb[0].mxu0 %v119
    %v252 = vpop.f32.mrb[0].mxu0
    %v253 = vadd.f32 %v80, %v252
    %v254 = vpop.f32.mrb[0].mxu0
    %v255 = vpop.f32.mrb[0].mxu0
    %v256 = vadd.f32 %v80, %v255
    %v257 = vpop.f32.mrb[0].mxu0
    %258 = vmatprep.mubr.bf16.mxu0 0
    %259 = vmatmul.mubr.bf16.gmra.mrb[0].mxu0 %v120
    %v260 = vpop.f32.mrb[0].mxu0
    %v261 = vadd.f32 %v80, %v260
    %v262 = vpop.f32.mrb[0].mxu0
    %v263 = vpop.f32.mrb[0].mxu0
    %v264 = vadd.f32 %v80, %v263
    %v265 = vpop.f32.mrb[0].mxu0
    %266 = vmatprep.mubr.bf16.mxu0 0
    %267 = vmatmul.mubr.bf16.gmra.mrb[0].mxu0 %v121
    %v268 = vpop.f32.mrb[0].mxu0
    %v269 = vadd.f32 %v80, %v268
    %v270 = vpop.f32.mrb[0].mxu0
    %v271 = vpop.f32.mrb[0].mxu0
    %v272 = vadd.f32 %v80, %v271
    %v273 = vpop.f32.mrb[0].mxu0
    %274 = vdwg.mxu0
    %275 = vst [vmem:[%s3] sm:$0xff] %v213
    %276 = vst [vmem:[%s3 + $0x8] sm:$0xff] %v216
    %277 = vst [vmem:[%s3 + $0x10] sm:$0xff] %v221
    %278 = vst [vmem:[%s3 + $0x18] sm:$0xff] %v224
    %279 = vst [vmem:[%s3 + $0x20] sm:$0xff] %v229
    %280 = vst [vmem:[%s3 + $0x28] sm:$0xff] %v232
    %281 = vst [vmem:[%s3 + $0x30] sm:$0xff] %v237
    %282 = vst [vmem:[%s3 + $0x38] sm:$0xff] %v240
    %283 = vst [vmem:[%s3 + $0x40] sm:$0xff] %v245
    %284 = vst [vmem:[%s3 + $0x48] sm:$0xff] %v248
    %285 = vst [vmem:[%s3 + $0x50] sm:$0xff] %v253
    %286 = vst [vmem:[%s3 + $0x58] sm:$0xff] %v256
    %287 = vst [vmem:[%s3 + $0x60] sm:$0xff] %v261
    %288 = vst [vmem:[%s3 + $0x68] sm:$0xff] %v264
    %289 = vst [vmem:[%s3 + $0x70] sm:$0xff] %v269
    %290 = vst [vmem:[%s3 + $0x78] sm:$0xff] %v272
    // Predicated region
    $region22: #{tpu_custom_call.1} parent=1 // pred_check
      _
    $region23: #{tpu_custom_call.1} parent=1 // pred_check_branch
      %292 = sbr.rel (0) target = $region25
    $region24: #{tpu_custom_call.1} parent=1 // pred_region
      _
    $region25: #{tpu_custom_call.1} parent=1 // pred_fallthru
      _
    // Predicated region
    $region26: #{tpu_custom_call.1} parent=1 // pred_check
      _
    $region27: #{tpu_custom_call.1} parent=1 // pred_check_branch
      %294 = sbr.rel (0) target = $region29
    $region28: #{tpu_custom_call.1} parent=1 // pred_region
      _
    $region29: #{tpu_custom_call.1} parent=1 // pred_fallthru
      _
    %295 = vsyncpa [#allocation3], 1
    %296 = vsyncpa [#allocation5], 1

</llo_original>
